<compile_context>
chip_gen: v6e
topology: v6e:2x2x1
jax: 0.10.0
libtpu: 0.0.40
codegen_flags: <defaults>
</compile_context>

<pallas_src>
import jax
import jax.numpy as jnp
from jax.experimental import pallas as pl
from jax.experimental.pallas import tpu as pltpu

_LANE = 128
_SUBLANE = 8


def _round_up(x, m):
    return ((x + m - 1) // m) * m


def _pad2(a, rows, cols):
    return jnp.pad(a, ((0, rows - a.shape[0]), (0, cols - a.shape[1])))


def _choose_tiles(n):
    """Pick (n_pad, tm, tk) for the A @ (.) aggregation grid."""
    if n <= 512:
        n_pad = _round_up(n, _SUBLANE)
        return n_pad, n_pad, n_pad          # single full-array block, grid (1,1)
    n_pad = _round_up(n, 256)
    return n_pad, 256, 256                  # double-buffered tiles fit v7x VMEM


# ---------------------------------------------------------------------------
# Kernels
# ---------------------------------------------------------------------------
def _stage1_kernel(a_ref, xk_ref, xi_ref, w1_ref, b1_ref, wn_ref, bn_ref,
                   h1_ref, node_ref, sub_ref, acc1_ref, accs_ref):
    """Fused pass 1 over A tiles (grid = (i rows, k reduction)):

         h1[i]   = ReLU( sum_k A[i,k] @ (X[k] @ W1) + b1 )      (GCN layer 1)
         node[i] = ReLU( X[i] @ Wn + bn )                        (UniGNN stand-in)
         sub[i]  = sum_k A[i,k] @ ReLU( X[k] @ Wn + bn )
    """
    k = pl.program_id(1)
    nk = pl.num_programs(1)

    @pl.when(k == 0)
    def _():
        acc1_ref[...] = jnp.zeros_like(acc1_ref)
        accs_ref[...] = jnp.zeros_like(accs_ref)
        ni = jnp.dot(xi_ref[...], wn_ref[...],
                     preferred_element_type=jnp.float32)
        node_ref[...] = jnp.maximum(ni + bn_ref[...], 0.0).astype(node_ref.dtype)

    a = a_ref[...]                                          # bf16 (tm, tk)

    # GCN layer 1: feature transform on the k-side rows, then aggregate.
    xw1 = jnp.dot(xk_ref[...], w1_ref[...],
                  preferred_element_type=jnp.float32)       # (tk, C2p) f32
    acc1_ref[...] += jnp.dot(a, xw1.astype(a.dtype),
                             preferred_element_type=jnp.float32)

    # UniGNN 'sub' aggregation reuses the same A tile.
    nfeat = jnp.maximum(
        jnp.dot(xk_ref[...], wn_ref[...],
                preferred_element_type=jnp.float32) + bn_ref[...], 0.0)
    accs_ref[...] += jnp.dot(a, nfeat.astype(a.dtype),
                             preferred_element_type=jnp.float32)

    @pl.when(k == nk - 1)
    def _():
        h1_ref[...] = jnp.maximum(acc1_ref[...] + b1_ref[...],
                                  0.0).astype(h1_ref.dtype)
        sub_ref[...] = accs_ref[...].astype(sub_ref.dtype)


def _stage2_kernel(a_ref, h1k_ref, w2_ref, b2_ref, o_ref, acc_ref):
    """GCN layer 2: h_gnn[i] = ReLU( sum_k A[i,k] @ (h1[k] @ W2) + b2 )."""
    k = pl.program_id(1)

    @pl.when(k == 0)
    def _():
        acc_ref[...] = jnp.zeros_like(acc_ref)

    hw = jnp.dot(h1k_ref[...], w2_ref[...],
                 preferred_element_type=jnp.float32)
    acc_ref[...] += jnp.dot(a_ref[...], hw.astype(a_ref.dtype),
                            preferred_element_type=jnp.float32)

    @pl.when(k == pl.num_programs(1) - 1)
    def _():
        o_ref[...] = jnp.maximum(acc_ref[...] + b2_ref[...],
                                 0.0).astype(o_ref.dtype)


# ---------------------------------------------------------------------------
# pallas_call wrappers
# ---------------------------------------------------------------------------
_COMPILER_PARAMS = pltpu.CompilerParams(
    dimension_semantics=("parallel", "arbitrary"),   # rows shard over cores
    vmem_limit_bytes=48 * 1024 * 1024,               # headroom under v7x 64 MiB
)


def _stage1(a_p, x_p, w1_p, b1_p, wn_p, bn_p, tm, tk):
    n_pad, f = x_p.shape
    c2p = w1_p.shape[1]
    hp = wn_p.shape[1]
    grid = (n_pad // tm, n_pad // tk)
    return pl.pallas_call(
        _stage1_kernel,
        out_shape=(jax.ShapeDtypeStruct((n_pad, c2p), jnp.bfloat16),  # h1
                   jax.ShapeDtypeStruct((n_pad, hp), jnp.float32),    # node
                   jax.ShapeDtypeStruct((n_pad, hp), jnp.float32)),   # sub
        grid=grid,
        in_specs=[pl.BlockSpec((tm, tk), lambda i, k: (i, k)),   # A tile
                  pl.BlockSpec((tk, f), lambda i, k: (k, 0)),    # X (k rows)
                  pl.BlockSpec((tm, f), lambda i, k: (i, 0)),    # X (i rows)
                  pl.BlockSpec((f, c2p), lambda i, k: (0, 0)),   # W1
                  pl.BlockSpec((1, c2p), lambda i, k: (0, 0)),   # b1
                  pl.BlockSpec((f, hp), lambda i, k: (0, 0)),    # Wn
                  pl.BlockSpec((1, hp), lambda i, k: (0, 0))],   # bn
        out_specs=(pl.BlockSpec((tm, c2p), lambda i, k: (i, 0)),
                   pl.BlockSpec((tm, hp), lambda i, k: (i, 0)),
                   pl.BlockSpec((tm, hp), lambda i, k: (i, 0))),
        scratch_shapes=[pltpu.VMEM((tm, c2p), jnp.float32),
                        pltpu.VMEM((tm, hp), jnp.float32)],
        compiler_params=_COMPILER_PARAMS,
    )(a_p, x_p, x_p, w1_p, b1_p, wn_p, bn_p)


def _stage2(a_p, h1_p, w2_p, b2_p, tm, tk):
    n_pad, c2p = h1_p.shape
    cp = w2_p.shape[1]
    grid = (n_pad // tm, n_pad // tk)
    return pl.pallas_call(
        _stage2_kernel,
        out_shape=jax.ShapeDtypeStruct((n_pad, cp), jnp.float32),
        grid=grid,
        in_specs=[pl.BlockSpec((tm, tk), lambda i, k: (i, k)),    # A tile
                  pl.BlockSpec((tk, c2p), lambda i, k: (k, 0)),   # h1 (k rows)
                  pl.BlockSpec((c2p, cp), lambda i, k: (0, 0)),   # W2
                  pl.BlockSpec((1, cp), lambda i, k: (0, 0))],    # b2
        out_specs=pl.BlockSpec((tm, cp), lambda i, k: (i, 0)),
        scratch_shapes=[pltpu.VMEM((tm, cp), jnp.float32)],
        compiler_params=_COMPILER_PARAMS,
    )(a_p, h1_p, w2_p, b2_p)


def model_forward(params, x, a_hat):
    """Equivalent of Model.forward(base_model, x, edge_index, A), dense-A path."""
    n, f = x.shape
    c2 = params["w1"].shape[1]      # 2 * out_channels
    c = params["w2"].shape[1]       # out_channels
    h = params["wn"].shape[1]       # UniGNN hidden

    n_pad, tm, tk = _choose_tiles(n)
    c2p = _round_up(c2, _LANE)      # lane-dense output dims
    cp = _round_up(c, _LANE)
    hp = _round_up(h, _LANE)

    # Zero-padding + bf16 cast at the kernel boundary (exact: padded weight
    # cols / A rows-cols are zero and are sliced off below).
    a_p = _pad2(a_hat, n_pad, n_pad).astype(jnp.bfloat16)
    x_p = _pad2(x, n_pad, f).astype(jnp.bfloat16)
    w1_p = _pad2(params["w1"], f, c2p).astype(jnp.bfloat16)
    b1_p = _pad2(params["b1"].reshape(1, -1), 1, c2p).astype(jnp.float32)
    w2_p = _pad2(params["w2"], c2p, cp).astype(jnp.bfloat16)
    b2_p = _pad2(params["b2"].reshape(1, -1), 1, cp).astype(jnp.float32)
    wn_p = _pad2(params["wn"], f, hp).astype(jnp.bfloat16)
    bn_p = _pad2(params["bn"].reshape(1, -1), 1, hp).astype(jnp.float32)

    h1_p, node_p, sub_p = _stage1(a_p, x_p, w1_p, b1_p, wn_p, bn_p, tm, tk)
    h_gnn_p = _stage2(a_p, h1_p, w2_p, b2_p, tm, tk)

    h_gnn = h_gnn_p[:n, :c]
    node = node_p[:n, :h]
    sub = sub_p[:n, :h]
    graph = jnp.mean(node, axis=0, keepdims=True)   # tiny readout, plain JAX
    return h_gnn, {"node": node, "sub": sub, "graph": graph}


# ---------------------------------------------------------------------------
# Deterministic parameter init (Xavier-uniform like torch's GCN/Linear init)
# ---------------------------------------------------------------------------
def xavier_uniform(key, fan_in, fan_out):
    limit = jnp.sqrt(6.0 / (fan_in + fan_out))
    return jax.random.uniform(key, (fan_in, fan_out), jnp.float32, -limit, limit)


if __name__ == "__main__":
    key = jax.random.PRNGKey(0)
    N = 16            # number of nodes
    F_in = 32         # in_channels
    C_out = 16        # out_channels == num_hidden

    k0, k1, k2, k3, k4 = jax.random.split(key, 5)

    # node features
    x = jax.random.normal(k0, (N, F_in), jnp.float32)

    # random symmetric adjacency + self loops, GCN-normalized (plain-JAX glue)
    raw = jax.random.bernoulli(k1, 0.25, (N, N)).astype(jnp.float32)
    adj = jnp.maximum(raw, raw.T)
    adj = adj * (1.0 - jnp.eye(N)) + jnp.eye(N)          # A + I
    deg = jnp.sum(adj, axis=1)
    d_inv_sqrt = 1.0 / jnp.sqrt(deg)
    a_hat = adj * d_inv_sqrt[:, None] * d_inv_sqrt[None, :]

    # Encoder (k=2): GCN(F_in -> 2*C_out), GCN(2*C_out -> C_out)
    # UniGNN stand-in: (F_in -> C_out)
    params = {
        "w1": xavier_uniform(k2, F_in, 2 * C_out),
        "b1": jnp.zeros((2 * C_out,), jnp.float32),
        "w2": xavier_uniform(k3, 2 * C_out, C_out),
        "b2": jnp.zeros((C_out,), jnp.float32),
        "wn": xavier_uniform(k4, F_in, C_out),
        "bn": jnp.zeros((C_out,), jnp.float32),
    }
    # (fc1/fc2/att_v/att_e of Model are not used by Model.forward; omitted.)

    h_gnn, z = jax.jit(model_forward)(params, x, a_hat)
    jax.block_until_ready((h_gnn, z))

    assert h_gnn.shape == (N, C_out)
    assert z["node"].shape == (N, C_out)
    assert z["sub"].shape == (N, C_out)
    assert z["graph"].shape == (1, C_out)

    # Pure-JAX f32 reference (tolerances account for bf16 MXU operands).
    h1_ref = jnp.maximum(a_hat @ (x @ params["w1"]) + params["b1"], 0.0)
    h_gnn_ref = jnp.maximum(a_hat @ (h1_ref @ params["w2"]) + params["b2"], 0.0)
    node_ref = jnp.maximum(x @ params["wn"] + params["bn"], 0.0)
    sub_ref = a_hat @ node_ref
    graph_ref = jnp.mean(node_ref, axis=0, keepdims=True)

    assert bool(jnp.allclose(h_gnn, h_gnn_ref, atol=5e-2, rtol=5e-2))
    assert bool(jnp.allclose(z["node"], node_ref, atol=5e-2, rtol=5e-2))
    assert bool(jnp.allclose(z["sub"], sub_ref, atol=5e-2, rtol=5e-2))
    assert bool(jnp.allclose(z["graph"], graph_ref, atol=5e-2, rtol=5e-2))

    print("KERNEL_OK")
</pallas_src>

<mosaic_0001>
module attributes {stable_mosaic.version = 11 : i64} {
  func.func @_stage2_kernel(%arg0: i32, %arg1: i32, %arg2: memref<16x16xbf16, #tpu.memory_space<vmem>>, %arg3: memref<16x128xbf16, #tpu.memory_space<vmem>>, %arg4: memref<128x128xbf16, #tpu.memory_space<vmem>>, %arg5: memref<1x128xf32, #tpu.memory_space<vmem>>, %arg6: memref<16x128xf32, #tpu.memory_space<vmem>>, %arg7: memref<16x128xf32, #tpu.memory_space<vmem>>) attributes {dimension_semantics = [#tpu.dimension_semantics<parallel>, #tpu.dimension_semantics<arbitrary>], iteration_bounds = array<i64: 1, 1>, scalar_prefetch = 0 : i64, scratch_operands = 1 : i64, tpu.core_type = #tpu.core_type<tc>, window_params = [{transform_indices = @transform_0, window_bounds = array<i64: 16, 16>}, {transform_indices = @transform_1, window_bounds = array<i64: 16, 128>}, {pipeline_mode = #tpu.pipeline_mode<synchronous>, transform_indices = @transform_2, window_bounds = array<i64: 128, 128>}, {pipeline_mode = #tpu.pipeline_mode<synchronous>, transform_indices = @transform_3, window_bounds = array<i64: 1, 128>}, {transform_indices = @transform_4, window_bounds = array<i64: 16, 128>}]} {
    %c0_i32 = arith.constant 0 : i32
    %0 = arith.cmpi eq, %arg1, %c0_i32 : i32
    %1 = arith.extui %0 : i1 to i32
    %c0_i32_0 = arith.constant 0 : i32
    %2 = arith.cmpi ne, %1, %c0_i32_0 : i32
    scf.if %2 {
      %cst_13 = arith.constant 0.000000e+00 : f32
      %15 = vector.broadcast %cst_13 : f32 to vector<16x128xf32>
      %c0_14 = arith.constant 0 : index
      %c0_15 = arith.constant 0 : index
      %16 = vector.load %arg7[%c0_14, %c0_15] : memref<16x128xf32, #tpu.memory_space<vmem>>, vector<16x128xf32>
      tpu.vector_store %arg7[%c0_14, %c0_15], %15 {strides = array<i32>} : memref<16x128xf32, #tpu.memory_space<vmem>>, vector<16x128xf32>,
    } else {
    }
    %c0 = arith.constant 0 : index
    %c0_1 = arith.constant 0 : index
    %3 = vector.load %arg3[%c0, %c0_1] : memref<16x128xbf16, #tpu.memory_space<vmem>>, vector<16x128xbf16>
    %c0_2 = arith.constant 0 : index
    %c0_3 = arith.constant 0 : index
    %4 = vector.load %arg4[%c0_2, %c0_3] : memref<128x128xbf16, #tpu.memory_space<vmem>>, vector<128x128xbf16>
    %cst = arith.constant dense<0.000000e+00> : vector<16x128xf32>
    %5 = tpu.matmul %3, %4, %cst {dimension_numbers = #tpu.dot_dimension_numbers<[1], [0], [0], [1], [0, 0, 1, 1], [], []>} : vector<16x128xbf16>, vector<128x128xbf16>, vector<16x128xf32> -> vector<16x128xf32>
    %c0_4 = arith.constant 0 : index
    %c0_5 = arith.constant 0 : index
    %6 = vector.load %arg7[%c0_4, %c0_5] : memref<16x128xf32, #tpu.memory_space<vmem>>, vector<16x128xf32>
    %c0_6 = arith.constant 0 : index
    %c0_7 = arith.constant 0 : index
    %7 = vector.load %arg2[%c0_6, %c0_7] : memref<16x16xbf16, #tpu.memory_space<vmem>>, vector<16x16xbf16>
    %8 = arith.truncf %5 : vector<16x128xf32> to vector<16x128xbf16>
    %cst_8 = arith.constant dense<0.000000e+00> : vector<16x128xf32>
    %9 = tpu.matmul %7, %8, %cst_8 {dimension_numbers = #tpu.dot_dimension_numbers<[1], [0], [0], [1], [0, 0, 1, 1], [], []>} : vector<16x16xbf16>, vector<16x128xbf16>, vector<16x128xf32> -> vector<16x128xf32>
    %10 = arith.addf %6, %9 : vector<16x128xf32>
    %c0_9 = arith.constant 0 : index
    %c0_10 = arith.constant 0 : index
    %11 = vector.load %arg7[%c0_9, %c0_10] : memref<16x128xf32, #tpu.memory_space<vmem>>, vector<16x128xf32>
    tpu.vector_store %arg7[%c0_9, %c0_10], %10 {strides = array<i32>} : memref<16x128xf32, #tpu.memory_space<vmem>>, vector<16x128xf32>,
    %c0_i32_11 = arith.constant 0 : i32
    %12 = arith.cmpi eq, %arg1, %c0_i32_11 : i32
    %13 = arith.extui %12 : i1 to i32
    %c0_i32_12 = arith.constant 0 : i32
    %14 = arith.cmpi ne, %13, %c0_i32_12 : i32
    scf.if %14 {
      %c0_13 = arith.constant 0 : index
      %c0_14 = arith.constant 0 : index
      %15 = vector.load %arg7[%c0_13, %c0_14] : memref<16x128xf32, #tpu.memory_space<vmem>>, vector<16x128xf32>
      %c0_15 = arith.constant 0 : index
      %c0_16 = arith.constant 0 : index
      %16 = vector.load %arg5[%c0_15, %c0_16] : memref<1x128xf32, #tpu.memory_space<vmem>>, vector<1x128xf32>
      %17 = vector.broadcast %16 : vector<1x128xf32> to vector<16x128xf32>
      %18 = arith.addf %15, %17 : vector<16x128xf32>
      %cst_17 = arith.constant 0.000000e+00 : f32
      %19 = vector.broadcast %cst_17 : f32 to vector<16x128xf32>
      %20 = arith.maximumf %18, %19 : vector<16x128xf32>
      %c0_18 = arith.constant 0 : index
      %c0_19 = arith.constant 0 : index
      %21 = vector.load %arg6[%c0_18, %c0_19] : memref<16x128xf32, #tpu.memory_space<vmem>>, vector<16x128xf32>
      tpu.vector_store %arg6[%c0_18, %c0_19], %20 {strides = array<i32>} : memref<16x128xf32, #tpu.memory_space<vmem>>, vector<16x128xf32>,
    } else {
    }
    return
  }
  func.func @transform_0(%arg0: i32, %arg1: i32) -> (i32, i32) {
    %c0_i32 = arith.constant 0 : i32
    return %arg0, %arg1 : i32, i32
  }
  func.func @transform_1(%arg0: i32, %arg1: i32) -> (i32, i32) {
    %c0_i32 = arith.constant 0 : i32
    %c0_i32_0 = arith.constant 0 : i32
    return %arg1, %c0_i32 : i32, i32
  }
  func.func @transform_2(%arg0: i32, %arg1: i32) -> (i32, i32) {
    %c0_i32 = arith.constant 0 : i32
    %c0_i32_0 = arith.constant 0 : i32
    %c0_i32_1 = arith.constant 0 : i32
    return %c0_i32, %c0_i32_0 : i32, i32
  }
  func.func @transform_3(%arg0: i32, %arg1: i32) -> (i32, i32) {
    %c0_i32 = arith.constant 0 : i32
    %c0_i32_0 = arith.constant 0 : i32
    %c0_i32_1 = arith.constant 0 : i32
    return %c0_i32, %c0_i32_0 : i32, i32
  }
  func.func @transform_4(%arg0: i32, %arg1: i32) -> (i32, i32) {
    %c0_i32 = arith.constant 0 : i32
    %c0_i32_0 = arith.constant 0 : i32
    return %arg0, %c0_i32 : i32, i32
  }
}

module attributes {stable_mosaic.version = 11 : i64} {
  func.func @_stage1_kernel(%arg0: i32, %arg1: i32, %arg2: memref<16x16xbf16, #tpu.memory_space<vmem>>, %arg3: memref<16x32xbf16, #tpu.memory_space<vmem>>, %arg4: memref<16x32xbf16, #tpu.memory_space<vmem>>, %arg5: memref<32x128xbf16, #tpu.memory_space<vmem>>, %arg6: memref<1x128xf32, #tpu.memory_space<vmem>>, %arg7: memref<32x128xbf16, #tpu.memory_space<vmem>>, %arg8: memref<1x128xf32, #tpu.memory_space<vmem>>, %arg9: memref<16x128xbf16, #tpu.memory_space<vmem>>, %arg10: memref<16x128xf32, #tpu.memory_space<vmem>>, %arg11: memref<16x128xf32, #tpu.memory_space<vmem>>, %arg12: memref<16x128xf32, #tpu.memory_space<vmem>>, %arg13: memref<16x128xf32, #tpu.memory_space<vmem>>) attributes {dimension_semantics = [#tpu.dimension_semantics<parallel>, #tpu.dimension_semantics<arbitrary>], iteration_bounds = array<i64: 1, 1>, scalar_prefetch = 0 : i64, scratch_operands = 2 : i64, tpu.core_type = #tpu.core_type<tc>, window_params = [{transform_indices = @transform_0, window_bounds = array<i64: 16, 16>}, {transform_indices = @transform_1, window_bounds = array<i64: 16, 32>}, {transform_indices = @transform_2, window_bounds = array<i64: 16, 32>}, {pipeline_mode = #tpu.pipeline_mode<synchronous>, transform_indices = @transform_3, window_bounds = array<i64: 32, 128>}, {pipeline_mode = #tpu.pipeline_mode<synchronous>, transform_indices = @transform_4, window_bounds = array<i64: 1, 128>}, {pipeline_mode = #tpu.pipeline_mode<synchronous>, transform_indices = @transform_5, window_bounds = array<i64: 32, 128>}, {pipeline_mode = #tpu.pipeline_mode<synchronous>, transform_indices = @transform_6, window_bounds = array<i64: 1, 128>}, {transform_indices = @transform_7, window_bounds = array<i64: 16, 128>}, {transform_indices = @transform_8, window_bounds = array<i64: 16, 128>}, {transform_indices = @transform_9, window_bounds = array<i64: 16, 128>}]} {
    %c0_i32 = arith.constant 0 : i32
    %0 = arith.cmpi eq, %arg1, %c0_i32 : i32
    %1 = arith.extui %0 : i1 to i32
    %c0_i32_0 = arith.constant 0 : i32
    %2 = arith.cmpi ne, %1, %c0_i32_0 : i32
    scf.if %2 {
      %cst_26 = arith.constant 0.000000e+00 : f32
      %28 = vector.broadcast %cst_26 : f32 to vector<16x128xf32>
      %c0_27 = arith.constant 0 : index
      %c0_28 = arith.constant 0 : index
      %29 = vector.load %arg12[%c0_27, %c0_28] : memref<16x128xf32, #tpu.memory_space<vmem>>, vector<16x128xf32>
      tpu.vector_store %arg12[%c0_27, %c0_28], %28 {strides = array<i32>} : memref<16x128xf32, #tpu.memory_space<vmem>>, vector<16x128xf32>,
      %cst_29 = arith.constant 0.000000e+00 : f32
      %30 = vector.broadcast %cst_29 : f32 to vector<16x128xf32>
      %c0_30 = arith.constant 0 : index
      %c0_31 = arith.constant 0 : index
      %31 = vector.load %arg13[%c0_30, %c0_31] : memref<16x128xf32, #tpu.memory_space<vmem>>, vector<16x128xf32>
      tpu.vector_store %arg13[%c0_30, %c0_31], %30 {strides = array<i32>} : memref<16x128xf32, #tpu.memory_space<vmem>>, vector<16x128xf32>,
      %c0_32 = arith.constant 0 : index
      %c0_33 = arith.constant 0 : index
      %32 = vector.load %arg4[%c0_32, %c0_33] : memref<16x32xbf16, #tpu.memory_space<vmem>>, vector<16x32xbf16>
      %c0_34 = arith.constant 0 : index
      %c0_35 = arith.constant 0 : index
      %33 = vector.load %arg7[%c0_34, %c0_35] : memref<32x128xbf16, #tpu.memory_space<vmem>>, vector<32x128xbf16>
      %cst_36 = arith.constant dense<0.000000e+00> : vector<16x128xf32>
      %34 = tpu.matmul %32, %33, %cst_36 {dimension_numbers = #tpu.dot_dimension_numbers<[1], [0], [0], [1], [0, 0, 1, 1], [], []>} : vector<16x32xbf16>, vector<32x128xbf16>, vector<16x128xf32> -> vector<16x128xf32>
      %c0_37 = arith.constant 0 : index
      %c0_38 = arith.constant 0 : index
      %35 = vector.load %arg8[%c0_37, %c0_38] : memref<1x128xf32, #tpu.memory_space<vmem>>, vector<1x128xf32>
      %36 = vector.broadcast %35 : vector<1x128xf32> to vector<16x128xf32>
      %37 = arith.addf %34, %36 : vector<16x128xf32>
      %cst_39 = arith.constant 0.000000e+00 : f32
      %38 = vector.broadcast %cst_39 : f32 to vector<16x128xf32>
      %39 = arith.maximumf %37, %38 : vector<16x128xf32>
      %c0_40 = arith.constant 0 : index
      %c0_41 = arith.constant 0 : index
      %40 = vector.load %arg10[%c0_40, %c0_41] : memref<16x128xf32, #tpu.memory_space<vmem>>, vector<16x128xf32>
      tpu.vector_store %arg10[%c0_40, %c0_41], %39 {strides = array<i32>} : memref<16x128xf32, #tpu.memory_space<vmem>>, vector<16x128xf32>,
    } else {
    }
    %c0 = arith.constant 0 : index
    %c0_1 = arith.constant 0 : index
    %3 = vector.load %arg2[%c0, %c0_1] : memref<16x16xbf16, #tpu.memory_space<vmem>>, vector<16x16xbf16>
    %c0_2 = arith.constant 0 : index
    %c0_3 = arith.constant 0 : index
    %4 = vector.load %arg3[%c0_2, %c0_3] : memref<16x32xbf16, #tpu.memory_space<vmem>>, vector<16x32xbf16>
    %c0_4 = arith.constant 0 : index
    %c0_5 = arith.constant 0 : index
    %5 = vector.load %arg5[%c0_4, %c0_5] : memref<32x128xbf16, #tpu.memory_space<vmem>>, vector<32x128xbf16>
    %cst = arith.constant dense<0.000000e+00> : vector<16x128xf32>
    %6 = tpu.matmul %4, %5, %cst {dimension_numbers = #tpu.dot_dimension_numbers<[1], [0], [0], [1], [0, 0, 1, 1], [], []>} : vector<16x32xbf16>, vector<32x128xbf16>, vector<16x128xf32> -> vector<16x128xf32>
    %c0_6 = arith.constant 0 : index
    %c0_7 = arith.constant 0 : index
    %7 = vector.load %arg12[%c0_6, %c0_7] : memref<16x128xf32, #tpu.memory_space<vmem>>, vector<16x128xf32>
    %8 = arith.truncf %6 : vector<16x128xf32> to vector<16x128xbf16>
    %cst_8 = arith.constant dense<0.000000e+00> : vector<16x128xf32>
    %9 = tpu.matmul %3, %8, %cst_8 {dimension_numbers = #tpu.dot_dimension_numbers<[1], [0], [0], [1], [0, 0, 1, 1], [], []>} : vector<16x16xbf16>, vector<16x128xbf16>, vector<16x128xf32> -> vector<16x128xf32>
    %10 = arith.addf %7, %9 : vector<16x128xf32>
    %c0_9 = arith.constant 0 : index
    %c0_10 = arith.constant 0 : index
    %11 = vector.load %arg12[%c0_9, %c0_10] : memref<16x128xf32, #tpu.memory_space<vmem>>, vector<16x128xf32>
    tpu.vector_store %arg12[%c0_9, %c0_10], %10 {strides = array<i32>} : memref<16x128xf32, #tpu.memory_space<vmem>>, vector<16x128xf32>,
    %c0_11 = arith.constant 0 : index
    %c0_12 = arith.constant 0 : index
    %12 = vector.load %arg3[%c0_11, %c0_12] : memref<16x32xbf16, #tpu.memory_space<vmem>>, vector<16x32xbf16>
    %c0_13 = arith.constant 0 : index
    %c0_14 = arith.constant 0 : index
    %13 = vector.load %arg7[%c0_13, %c0_14] : memref<32x128xbf16, #tpu.memory_space<vmem>>, vector<32x128xbf16>
    %cst_15 = arith.constant dense<0.000000e+00> : vector<16x128xf32>
    %14 = tpu.matmul %12, %13, %cst_15 {dimension_numbers = #tpu.dot_dimension_numbers<[1], [0], [0], [1], [0, 0, 1, 1], [], []>} : vector<16x32xbf16>, vector<32x128xbf16>, vector<16x128xf32> -> vector<16x128xf32>
    %c0_16 = arith.constant 0 : index
    %c0_17 = arith.constant 0 : index
    %15 = vector.load %arg8[%c0_16, %c0_17] : memref<1x128xf32, #tpu.memory_space<vmem>>, vector<1x128xf32>
    %16 = vector.broadcast %15 : vector<1x128xf32> to vector<16x128xf32>
    %17 = arith.addf %14, %16 : vector<16x128xf32>
    %cst_18 = arith.constant 0.000000e+00 : f32
    %18 = vector.broadcast %cst_18 : f32 to vector<16x128xf32>
    %19 = arith.maximumf %17, %18 : vector<16x128xf32>
    %c0_19 = arith.constant 0 : index
    %c0_20 = arith.constant 0 : index
    %20 = vector.load %arg13[%c0_19, %c0_20] : memref<16x128xf32, #tpu.memory_space<vmem>>, vector<16x128xf32>
    %21 = arith.truncf %19 : vector<16x128xf32> to vector<16x128xbf16>
    %cst_21 = arith.constant dense<0.000000e+00> : vector<16x128xf32>
    %22 = tpu.matmul %3, %21, %cst_21 {dimension_numbers = #tpu.dot_dimension_numbers<[1], [0], [0], [1], [0, 0, 1, 1], [], []>} : vector<16x16xbf16>, vector<16x128xbf16>, vector<16x128xf32> -> vector<16x128xf32>
    %23 = arith.addf %20, %22 : vector<16x128xf32>
    %c0_22 = arith.constant 0 : index
    %c0_23 = arith.constant 0 : index
    %24 = vector.load %arg13[%c0_22, %c0_23] : memref<16x128xf32, #tpu.memory_space<vmem>>, vector<16x128xf32>
    tpu.vector_store %arg13[%c0_22, %c0_23], %23 {strides = array<i32>} : memref<16x128xf32, #tpu.memory_space<vmem>>, vector<16x128xf32>,
    %c0_i32_24 = arith.constant 0 : i32
    %25 = arith.cmpi eq, %arg1, %c0_i32_24 : i32
    %26 = arith.extui %25 : i1 to i32
    %c0_i32_25 = arith.constant 0 : i32
    %27 = arith.cmpi ne, %26, %c0_i32_25 : i32
    scf.if %27 {
      %c0_26 = arith.constant 0 : index
      %c0_27 = arith.constant 0 : index
      %28 = vector.load %arg12[%c0_26, %c0_27] : memref<16x128xf32, #tpu.memory_space<vmem>>, vector<16x128xf32>
      %c0_28 = arith.constant 0 : index
      %c0_29 = arith.constant 0 : index
      %29 = vector.load %arg6[%c0_28, %c0_29] : memref<1x128xf32, #tpu.memory_space<vmem>>, vector<1x128xf32>
      %30 = vector.broadcast %29 : vector<1x128xf32> to vector<16x128xf32>
      %31 = arith.addf %28, %30 : vector<16x128xf32>
      %cst_30 = arith.constant 0.000000e+00 : f32
      %32 = vector.broadcast %cst_30 : f32 to vector<16x128xf32>
      %33 = arith.maximumf %31, %32 : vector<16x128xf32>
      %34 = arith.truncf %33 : vector<16x128xf32> to vector<16x128xbf16>
      %c0_31 = arith.constant 0 : index
      %c0_32 = arith.constant 0 : index
      %35 = vector.load %arg9[%c0_31, %c0_32] : memref<16x128xbf16, #tpu.memory_space<vmem>>, vector<16x128xbf16>
      tpu.vector_store %arg9[%c0_31, %c0_32], %34 {strides = array<i32>} : memref<16x128xbf16, #tpu.memory_space<vmem>>, vector<16x128xbf16>,
      %c0_33 = arith.constant 0 : index
      %c0_34 = arith.constant 0 : index
      %36 = vector.load %arg13[%c0_33, %c0_34] : memref<16x128xf32, #tpu.memory_space<vmem>>, vector<16x128xf32>
      %c0_35 = arith.constant 0 : index
      %c0_36 = arith.constant 0 : index
      %37 = vector.load %arg11[%c0_35, %c0_36] : memref<16x128xf32, #tpu.memory_space<vmem>>, vector<16x128xf32>
      tpu.vector_store %arg11[%c0_35, %c0_36], %36 {strides = array<i32>} : memref<16x128xf32, #tpu.memory_space<vmem>>, vector<16x128xf32>,
    } else {
    }
    return
  }
  func.func @transform_0(%arg0: i32, %arg1: i32) -> (i32, i32) {
    %c0_i32 = arith.constant 0 : i32
    return %arg0, %arg1 : i32, i32
  }
  func.func @transform_1(%arg0: i32, %arg1: i32) -> (i32, i32) {
    %c0_i32 = arith.constant 0 : i32
    %c0_i32_0 = arith.constant 0 : i32
    return %arg1, %c0_i32 : i32, i32
  }
  func.func @transform_2(%arg0: i32, %arg1: i32) -> (i32, i32) {
    %c0_i32 = arith.constant 0 : i32
    %c0_i32_0 = arith.constant 0 : i32
    return %arg0, %c0_i32 : i32, i32
  }
  func.func @transform_3(%arg0: i32, %arg1: i32) -> (i32, i32) {
    %c0_i32 = arith.constant 0 : i32
    %c0_i32_0 = arith.constant 0 : i32
    %c0_i32_1 = arith.constant 0 : i32
    return %c0_i32, %c0_i32_0 : i32, i32
  }
  func.func @transform_4(%arg0: i32, %arg1: i32) -> (i32, i32) {
    %c0_i32 = arith.constant 0 : i32
    %c0_i32_0 = arith.constant 0 : i32
    %c0_i32_1 = arith.constant 0 : i32
    return %c0_i32, %c0_i32_0 : i32, i32
  }
  func.func @transform_5(%arg0: i32, %arg1: i32) -> (i32, i32) {
    %c0_i32 = arith.constant 0 : i32
    %c0_i32_0 = arith.constant 0 : i32
    %c0_i32_1 = arith.constant 0 : i32
    return %c0_i32, %c0_i32_0 : i32, i32
  }
  func.func @transform_6(%arg0: i32, %arg1: i32) -> (i32, i32) {
    %c0_i32 = arith.constant 0 : i32
    %c0_i32_0 = arith.constant 0 : i32
    %c0_i32_1 = arith.constant 0 : i32
    return %c0_i32, %c0_i32_0 : i32, i32
  }
  func.func @transform_7(%arg0: i32, %arg1: i32) -> (i32, i32) {
    %c0_i32 = arith.constant 0 : i32
    %c0_i32_0 = arith.constant 0 : i32
    return %arg0, %c0_i32 : i32, i32
  }
  func.func @transform_8(%arg0: i32, %arg1: i32) -> (i32, i32) {
    %c0_i32 = arith.constant 0 : i32
    %c0_i32_0 = arith.constant 0 : i32
    return %arg0, %c0_i32 : i32, i32
  }
  func.func @transform_9(%arg0: i32, %arg1: i32) -> (i32, i32) {
    %c0_i32 = arith.constant 0 : i32
    %c0_i32_0 = arith.constant 0 : i32
    return %arg0, %c0_i32 : i32, i32
  }
}

</mosaic_0001>

<llo_original>
// kernel: model_forward.3
$region0: #{model_forward.3}
  #allocation0 [shape = 'u32[]', space=smem, size = 0x4, offset = 0x4, fixed_abs, tag = 'smem constant byte address 0x4 - core index']
  #allocation1 [shape = 'u32[144,128]{1,0:T(1,128)}', space=vmem, size = 0x12000, scoped, tag = 'internal scratch']
  #allocation2 [shape = 'f32[16,128]{1,0:T(8,128)}', space=vmem, size = 0x2000, scoped, tag = 'scratch operand']
  %s0 = inlined_call_operand.vmem [shape: bf16[16,16], index: 0, kind: input, shape index: {}]
  %s1 = inlined_call_operand.vmem [shape: bf16[16,128], index: 1, kind: input, shape index: {}]
  %s2 = inlined_call_operand.vmem [shape: bf16[128,128], index: 2, kind: input, shape index: {}]
  %s3 = inlined_call_operand.vmem [shape: f32[1,128], index: 3, kind: input, shape index: {}]
  %s4 = inlined_call_operand.hbm [shape: f32[16,128], index: 4, kind: output, shape index: {}]
  %s5 = sld [smem:[#allocation0]]
  $region34: #{model_forward.3} parent=0
    _
  %s7 = ssub.s32 1, %s5
  %s8 = scalar_select 0, %s7, %s5
  $region1: #{model_forward.3} parent=0
    #allocation3 [shape = 'u8[8192]{0}', space=vmem, size = 0x2000, scoped, tag = 'output window, operand 0, single buffered']
    #allocation4 [shape = 's32[1]{0}', space=sflag, size = 0x4, scoped, tag = 'scoped memory for model_forward.3']
    %9 = vsyncpa [#allocation4], 0
    // Predicated region
    $region2: #{model_forward.3} parent=1 // pred_check
      _
    $region3: #{model_forward.3} parent=1 // pred_check_branch
      %11 = sbr.rel (0) target = $region5
    $region4: #{model_forward.3} parent=1 // pred_region
      _
    $region5: #{model_forward.3} parent=1 // pred_fallthru
      _
    // Predicated region
    $region6: #{model_forward.3} parent=1 // pred_check
      _
    $region7: #{model_forward.3} parent=1 // pred_check_branch
      %13 = sbr.rel (0) target = $region9
    $region8: #{model_forward.3} parent=1 // pred_region
      _
    $region9: #{model_forward.3} parent=1 // pred_fallthru
      _
    // Predicated region
    $region10: #{model_forward.3} parent=1 // pred_check
      _
    $region11: #{model_forward.3} parent=1 // pred_check_branch
      %15 = sbr.rel (0) target = $region13
    $region12: #{model_forward.3} parent=1 // pred_region
      _
    $region13: #{model_forward.3} parent=1 // pred_fallthru
      _
    // Predicated region
    $region14: #{model_forward.3} parent=1 // pred_check
      _
    $region15: #{model_forward.3} parent=1 // pred_check_branch
      %17 = sbr.rel (0) target = $region17
    $region16: #{model_forward.3} parent=1 // pred_region
      _
    $region17: #{model_forward.3} parent=1 // pred_fallthru
      _
    %p19 = scmp.eq.s32.totalorder 0, 0
    // Predicated region
    $region18: #{model_forward.3} parent=1 // pred_check
      %p20 = pneg %p19
    $region19: #{model_forward.3} parent=1 // pred_check_branch
      %22 = sbr.rel (%p20) target = $region21
    $region20: #{model_forward.3} parent=1 // pred_region
      %23 = vst [vmem:[#allocation2] sm:$0xff] 0.0
      %24 = vst [vmem:[#allocation2 + $0x8] sm:$0xff] 0.0
    $region21: #{model_forward.3} parent=1 // pred_fallthru
      _
    %v25 = vld [vmem:[%s1] sm:$0xf]
    %v26 = vld [vmem:[%s1 + $0x4] sm:$0xf]
    %v27 = vld [vmem:[%s2] sm:$0xf]
    %v28 = vld [vmem:[%s2 + $0x4] sm:$0xf]
    %v29 = vld [vmem:[%s2 + $0x8] sm:$0xf]
    %v30 = vld [vmem:[%s2 + $0xc] sm:$0xf]
    %v31 = vld [vmem:[%s2 + $0x10] sm:$0xf]
    %v32 = vld [vmem:[%s2 + $0x14] sm:$0xf]
    %v33 = vld [vmem:[%s2 + $0x18] sm:$0xf]
    %v34 = vld [vmem:[%s2 + $0x1c] sm:$0xf]
    %v35 = vld [vmem:[%s2 + $0x20] sm:$0xf]
    %v36 = vld [vmem:[%s2 + $0x24] sm:$0xf]
    %v37 = vld [vmem:[%s2 + $0x28] sm:$0xf]
    %v38 = vld [vmem:[%s2 + $0x2c] sm:$0xf]
    %v39 = vld [vmem:[%s2 + $0x30] sm:$0xf]
    %v40 = vld [vmem:[%s2 + $0x34] sm:$0xf]
    %v41 = vld [vmem:[%s2 + $0x38] sm:$0xf]
    %v42 = vld [vmem:[%s2 + $0x3c] sm:$0xf]
    %v45 = vunpack.c.l.b16 %v25
    %v46 = vunpack.c.l.b16 %v26
    %v47 = vpack.c.b16 %v46, %v45
    %v65 = vunpack.c.l.b16 %v27
    %v66 = vunpack.c.l.b16 %v28
    %v67 = vunpack.c.l.b16 %v29
    %v68 = vunpack.c.l.b16 %v30
    %v69 = vunpack.c.l.b16 %v31
    %v70 = vunpack.c.l.b16 %v32
    %v71 = vunpack.c.l.b16 %v33
    %v72 = vunpack.c.l.b16 %v34
    %v73 = vunpack.c.l.b16 %v35
    %v74 = vunpack.c.l.b16 %v36
    %v75 = vunpack.c.l.b16 %v37
    %v76 = vunpack.c.l.b16 %v38
    %v77 = vunpack.c.l.b16 %v39
    %v78 = vunpack.c.l.b16 %v40
    %v79 = vunpack.c.l.b16 %v41
    %v80 = vunpack.c.l.b16 %v42
    %v81 = vpack.c.b16 %v66, %v65
    %v82 = vpack.c.b16 %v68, %v67
    %v83 = vpack.c.b16 %v70, %v69
    %v84 = vpack.c.b16 %v72, %v71
    %v85 = vpack.c.b16 %v74, %v73
    %v86 = vpack.c.b16 %v76, %v75
    %v87 = vpack.c.b16 %v78, %v77
    %v88 = vpack.c.b16 %v80, %v79
    %97 = vmatprep.subr.bf16.mxu0 0
    %98 = vmatpush1.bf16.msra.mxu0 %v88
    %99 = vmatprep.subr.bf16.mxu0 0
    %100 = vmatpush1.bf16.msra.mxu0 %v87
    %101 = vmatprep.subr.bf16.mxu0 0
    %102 = vmatpush1.bf16.msra.mxu0 %v86
    %103 = vmatprep.subr.bf16.mxu0 0
    %104 = vmatpush1.bf16.msra.mxu0 %v85
    %105 = vmatprep.subr.bf16.mxu0 0
    %106 = vmatpush1.bf16.msra.mxu0 %v84
    %107 = vmatprep.subr.bf16.mxu0 0
    %108 = vmatpush1.bf16.msra.mxu0 %v83
    %109 = vmatprep.subr.bf16.mxu0 0
    %110 = vmatpush1.bf16.msra.mxu0 %v82
    %111 = vmatprep.subr.bf16.mxu0 0
    %112 = vmatpush1.bf16.msra.mxu0 %v81
    %113 = vmatprep.subr.bf16.mxu0 0
    %114 = vmatpush2.bf16.msra.mxu0 0
    %115 = vmatprep.subr.bf16.mxu0 0
    %116 = vmatpush2.bf16.msra.mxu0 0
    %117 = vmatprep.subr.bf16.mxu0 0
    %118 = vmatpush2.bf16.msra.mxu0 0
    %119 = vmatprep.subr.bf16.mxu0 0
    %120 = vmatpush2.bf16.msra.mxu0 0
    %121 = vmatprep.subr.bf16.mxu0 0
    %122 = vmatpush2.bf16.msra.mxu0 0
    %123 = vmatprep.subr.bf16.mxu0 0
    %124 = vmatpush2.bf16.msra.mxu0 0
    %125 = vmatprep.subr.bf16.mxu0 0
    %126 = vmatpush2.bf16.msra.mxu0 0
    %127 = vmatprep.subr.bf16.mxu0 0
    %128 = vmatpush2.bf16.msra.mxu0 0
    %129 = vmatprep.mubr.bf16.mxu0 0
    %130 = vmatmul.mubr.bf16.gmra.mxu0 %v47
    %v131 = vpop.f32.mrf.mxu0
    %v132 = vadd.f32 0.0, %v131
    %v133 = vpop.f32.mrf.mxu0
    %v134 = vpop.f32.mrf.mxu0
    %v135 = vadd.f32 0.0, %v134
    %v136 = vpop.f32.mrf.mxu0
    %137 = vdwg.mxu0
    %v138 = vld [vmem:[#allocation2] sm:$0xff]
    %v139 = vld [vmem:[#allocation2 + $0x8] sm:$0xff]
    %v140 = vld [vmem:[%s0] sm:$0xf]
    %v141 = vld [vmem:[%s0 + $0x4] sm:$0xf]
    %v142 = vpack.c.bf16 %v135, %v132
    %v145 = vunpack.c.l.b16 %v140
    %v146 = vunpack.c.l.b16 %v141
    %v147 = vpack.c.b16 %v146, %v145
    %vm148 = vcmask 130048
    %v150 = vsel %vm148, %v147, 0
    %152 = vmatprep.subr.bf16.mxu0 0
    %153 = vmatpush1.bf16.msra.mxu0 0
    %154 = vmatprep.subr.bf16.mxu0 0
    %155 = vmatpush1.bf16.msra.mxu0 0
    %156 = vmatprep.subr.bf16.mxu0 0
    %157 = vmatpush1.bf16.msra.mxu0 0
    %158 = vmatprep.subr.bf16.mxu0 0
    %159 = vmatpush1.bf16.msra.mxu0 0
    %160 = vmatprep.subr.bf16.mxu0 0
    %161 = vmatpush1.bf16.msra.mxu0 0
    %162 = vmatprep.subr.bf16.mxu0 0
    %163 = vmatpush1.bf16.msra.mxu0 0
    %164 = vmatprep.subr.bf16.mxu0 0
    %165 = vmatpush1.bf16.msra.mxu0 0
    %166 = vmatprep.subr.bf16.mxu0 0
    %167 = vmatpush1.bf16.msra.mxu0 %v142
    %168 = vmatprep.subr.bf16.mxu0 0
    %169 = vmatpush2.bf16.msra.mxu0 0
    %170 = vmatprep.subr.bf16.mxu0 0
    %171 = vmatpush2.bf16.msra.mxu0 0
    %172 = vmatprep.subr.bf16.mxu0 0
    %173 = vmatpush2.bf16.msra.mxu0 0
    %174 = vmatprep.subr.bf16.mxu0 0
    %175 = vmatpush2.bf16.msra.mxu0 0
    %176 = vmatprep.subr.bf16.mxu0 0
    %177 = vmatpush2.bf16.msra.mxu0 0
    %178 = vmatprep.subr.bf16.mxu0 0
    %179 = vmatpush2.bf16.msra.mxu0 0
    %180 = vmatprep.subr.bf16.mxu0 0
    %181 = vmatpush2.bf16.msra.mxu0 0
    %182 = vmatprep.subr.bf16.mxu0 0
    %183 = vmatpush2.bf16.msra.mxu0 0
    %184 = vmatprep.mubr.bf16.mxu0 0
    %185 = vmatmul.mubr.bf16.gmra.mxu0 %v150
    %v186 = vpop.f32.mrf.mxu0
    %v187 = vadd.f32 0.0, %v186
    %v188 = vpop.f32.mrf.mxu0
    %v189 = vpop.f32.mrf.mxu0
    %v190 = vadd.f32 0.0, %v189
    %v191 = vpop.f32.mrf.mxu0
    %192 = vdwg.mxu0
    %v193 = vadd.f32 %v138, %v187
    %v194 = vadd.f32 %v139, %v190
    %195 = vst [vmem:[#allocation2] sm:$0xff] %v193
    %196 = vst [vmem:[#allocation2 + $0x8] sm:$0xff] %v194
    // Predicated region
    $region22: #{model_forward.3} parent=1 // pred_check
      %p197 = pneg %p19
    $region23: #{model_forward.3} parent=1 // pred_check_branch
      %199 = sbr.rel (%p197) target = $region25
    $region24: #{model_forward.3} parent=1 // pred_region
      %v200 = vld [vmem:[#allocation2] sm:$0xff]
      %v201 = vld [vmem:[#allocation2 + $0x8] sm:$0xff]
      %v202 = vld [vmem:[%s3] sm:$0x1]
      %v204 = vlaneseq
      %v205 = vshrl.u32 %v204, 7
      %v206 = vsub.s32 0, %v205
      %v207 = vrot.slane %v202, %v206
      %v209 = vadd.f32 %v200, %v207
      %v210 = vadd.f32 %v201, %v207
      %v211 = vmax.f32 %v209, 0.0
      %v212 = vmax.f32 %v210, 0.0
      %213 = vst [vmem:[#allocation3] sm:$0xff] %v211
      %214 = vst [vmem:[#allocation3 + $0x8] sm:$0xff] %v212
    $region25: #{model_forward.3} parent=1 // pred_fallthru
      _
    // Predicated region
    $region26: #{model_forward.3} parent=1 // pred_check
      _
    $region27: #{model_forward.3} parent=1 // pred_check_branch
      %216 = sbr.rel (0) target = $region29
    $region28: #{model_forward.3} parent=1 // pred_region
      %s218 = ssub.s32 256, 256
      %219 = vsyncadd [#allocation4], %s218
      %s220 = sshll.u32 [#allocation3], 4
      %s221 = int_to_ptr.vmem [resolvable:$true] %s220
      %226 = dma.vmem_to_hbm [thread:$0]  %s221, 256, %s4, [#allocation4], 128, 128, 8
    $region29: #{model_forward.3} parent=1 // pred_fallthru
      _
    // Predicated region
    $region30: #{model_forward.3} parent=1 // pred_check
      _
    $region31: #{model_forward.3} parent=1 // pred_check_branch
      %228 = sbr.rel (0) target = $region33
    $region32: #{model_forward.3} parent=1 // pred_region
      %229 = dma.done [#allocation4], 256
    $region33: #{model_forward.3} parent=1 // pred_fallthru
      _
    %230 = vsyncpa [#allocation4], 1

// kernel: model_forward.2
$region0: #{model_forward.2}
  #allocation0 [shape = 'u32[]', space=smem, size = 0x4, offset = 0x4, fixed_abs, tag = 'smem constant byte address 0x4 - core index']
  #allocation1 [shape = 'u32[144,128]{1,0:T(1,128)}', space=vmem, size = 0x12000, scoped, tag = 'internal scratch']
  #allocation2 [shape = 'f32[16,128]{1,0:T(8,128)}', space=vmem, size = 0x2000, scoped, tag = 'scratch operand']
  #allocation3 [shape = 'f32[16,128]{1,0:T(8,128)}', space=vmem, size = 0x2000, scoped, tag = 'scratch operand']
  %s0 = inlined_call_operand.vmem [shape: bf16[16,16], index: 0, kind: input, shape index: {}]
  %s1 = inlined_call_operand.vmem [shape: bf16[16,32], index: 1, kind: input, shape index: {}, may-alias: {1,2}]
  %s2 = inlined_call_operand.vmem [shape: bf16[16,32], index: 2, kind: input, shape index: {}, may-alias: {1,2}]
  %s3 = inlined_call_operand.vmem [shape: bf16[32,128], index: 3, kind: input, shape index: {}]
  %s4 = inlined_call_operand.vmem [shape: f32[1,128], index: 4, kind: input, shape index: {}]
  %s5 = inlined_call_operand.vmem [shape: bf16[32,128], index: 5, kind: input, shape index: {}]
  %s6 = inlined_call_operand.vmem [shape: f32[1,128], index: 6, kind: input, shape index: {}]
  %s7 = inlined_call_operand.vmem [shape: bf16[16,128], index: 7, kind: output, shape index: {0}]
  %s8 = inlined_call_operand.vmem [shape: f32[16,128], index: 8, kind: output, shape index: {1}]
  %s9 = inlined_call_operand.hbm [shape: f32[16,128], index: 9, kind: output, shape index: {2}]
  %10 = xla_tuple %s7, %s8, %s9
  %s11 = sld [smem:[#allocation0]]
  $region62: #{model_forward.2} parent=0
    _
  %s13 = ssub.s32 1, %s11
  %s14 = scalar_select 0, %s13, %s11
  $region1: #{model_forward.2} parent=0
    #allocation4 [shape = 'u8[8192]{0}', space=vmem, size = 0x2000, scoped, tag = 'output window, operand 2, single buffered']
    #allocation5 [shape = 's32[1]{0}', space=sflag, size = 0x4, scoped, tag = 'scoped memory for model_forward.2']
    %15 = vsyncpa [#allocation5], 0
    // Predicated region
    $region2: #{model_forward.2} parent=1 // pred_check
      _
    $region3: #{model_forward.2} parent=1 // pred_check_branch
      %17 = sbr.rel (0) target = $region5
    $region4: #{model_forward.2} parent=1 // pred_region
      _
    $region5: #{model_forward.2} parent=1 // pred_fallthru
      _
    // Predicated region
    $region6: #{model_forward.2} parent=1 // pred_check
      _
    $region7: #{model_forward.2} parent=1 // pred_check_branch
      %19 = sbr.rel (0) target = $region9
    $region8: #{model_forward.2} parent=1 // pred_region
      _
    $region9: #{model_forward.2} parent=1 // pred_fallthru
      _
    // Predicated region
    $region10: #{model_forward.2} parent=1 // pred_check
      _
    $region11: #{model_forward.2} parent=1 // pred_check_branch
      %21 = sbr.rel (0) target = $region13
    $region12: #{model_forward.2} parent=1 // pred_region
      _
    $region13: #{model_forward.2} parent=1 // pred_fallthru
      _
    // Predicated region
    $region14: #{model_forward.2} parent=1 // pred_check
      _
    $region15: #{model_forward.2} parent=1 // pred_check_branch
      %23 = sbr.rel (0) target = $region17
    $region16: #{model_forward.2} parent=1 // pred_region
      _
    $region17: #{model_forward.2} parent=1 // pred_fallthru
      _
    // Predicated region
    $region18: #{model_forward.2} parent=1 // pred_check
      _
    $region19: #{model_forward.2} parent=1 // pred_check_branch
      %25 = sbr.rel (0) target = $region21
    $region20: #{model_forward.2} parent=1 // pred_region
      _
    $region21: #{model_forward.2} parent=1 // pred_fallthru
      _
    // Predicated region
    $region22: #{model_forward.2} parent=1 // pred_check
      _
    $region23: #{model_forward.2} parent=1 // pred_check_branch
      %27 = sbr.rel (0) target = $region25
    $region24: #{model_forward.2} parent=1 // pred_region
      _
    $region25: #{model_forward.2} parent=1 // pred_fallthru
      _
    // Predicated region
    $region26: #{model_forward.2} parent=1 // pred_check
      _
    $region27: #{model_forward.2} parent=1 // pred_check_branch
      %29 = sbr.rel (0) target = $region29
    $region28: #{model_forward.2} parent=1 // pred_region
      _
    $region29: #{model_forward.2} parent=1 // pred_fallthru
      _
    %p31 = scmp.eq.s32.totalorder 0, 0
    // Predicated region
    $region30: #{model_forward.2} parent=1 // pred_check
      %p32 = pneg %p31
    $region31: #{model_forward.2} parent=1 // pred_check_branch
      %34 = sbr.rel (%p32) target = $region33
    $region32: #{model_forward.2} parent=1 // pred_region
      %35 = vst [vmem:[#allocation2] sm:$0xff] 0.0
      %36 = vst [vmem:[#allocation2 + $0x8] sm:$0xff] 0.0
      %37 = vst [vmem:[#allocation3] sm:$0xff] 0.0
      %38 = vst [vmem:[#allocation3 + $0x8] sm:$0xff] 0.0
      %v39 = vld [vmem:[%s2] sm:$0xf]
      %v40 = vld [vmem:[%s2 + $0x4] sm:$0xf]
      %v41 = vld [vmem:[%s5] sm:$0xf]
      %v42 = vld [vmem:[%s5 + $0x4] sm:$0xf]
      %v43 = vld [vmem:[%s5 + $0x8] sm:$0xf]
      %v44 = vld [vmem:[%s5 + $0xc] sm:$0xf]
      %v45 = vld [vmem:[%s6] sm:$0x1]
      %v47 = vlaneseq
      %v48 = vshrl.u32 %v47, 7
      %v49 = vsub.s32 0, %v48
      %v50 = vrot.slane %v45, %v49
      %v54 = vunpack.c.l.b16 %v39
      %v55 = vunpack.c.l.b16 %v40
      %v56 = vpack.c.b16 %v55, %v54
      %v61 = vunpack.c.l.b16 %v41
      %v62 = vunpack.c.l.b16 %v42
      %v63 = vunpack.c.l.b16 %v43
      %v64 = vunpack.c.l.b16 %v44
      %v65 = vpack.c.b16 %v62, %v61
      %v66 = vpack.c.b16 %v64, %v63
      %vm69 = vcmask 261120
      %v71 = vsel %vm69, %v56, 0
      %73 = vmatprep.subr.bf16.mxu0 0
      %74 = vmatpush1.bf16.msra.mxu0 0
      %75 = vmatprep.subr.bf16.mxu0 0
      %76 = vmatpush1.bf16.msra.mxu0 0
      %77 = vmatprep.subr.bf16.mxu0 0
      %78 = vmatpush1.bf16.msra.mxu0 0
      %79 = vmatprep.subr.bf16.mxu0 0
      %80 = vmatpush1.bf16.msra.mxu0 0
      %81 = vmatprep.subr.bf16.mxu0 0
      %82 = vmatpush1.bf16.msra.mxu0 0
      %83 = vmatprep.subr.bf16.mxu0 0
      %84 = vmatpush1.bf16.msra.mxu0 0
      %85 = vmatprep.subr.bf16.mxu0 0
      %86 = vmatpush1.bf16.msra.mxu0 %v66
      %87 = vmatprep.subr.bf16.mxu0 0
      %88 = vmatpush1.bf16.msra.mxu0 %v65
      %89 = vmatprep.subr.bf16.mxu0 0
      %90 = vmatpush2.bf16.msra.mxu0 0
      %91 = vmatprep.subr.bf16.mxu0 0
      %92 = vmatpush2.bf16.msra.mxu0 0
      %93 = vmatprep.subr.bf16.mxu0 0
      %94 = vmatpush2.bf16.msra.mxu0 0
      %95 = vmatprep.subr.bf16.mxu0 0
      %96 = vmatpush2.bf16.msra.mxu0 0
      %97 = vmatprep.subr.bf16.mxu0 0
      %98 = vmatpush2.bf16.msra.mxu0 0
      %99 = vmatprep.subr.bf16.mxu0 0
      %100 = vmatpush2.bf16.msra.mxu0 0
      %101 = vmatprep.subr.bf16.mxu0 0
      %102 = vmatpush2.bf16.msra.mxu0 0
      %103 = vmatprep.subr.bf16.mxu0 0
      %104 = vmatpush2.bf16.msra.mxu0 0
      %105 = vmatprep.mubr.bf16.mxu0 0
      %106 = vmatmul.mubr.bf16.gmra.mxu0 %v71
      %v107 = vpop.f32.mrf.mxu0
      %v108 = vadd.f32 %v50, %v107
      %v109 = vpop.f32.mrf.mxu0
      %v110 = vpop.f32.mrf.mxu0
      %v111 = vadd.f32 %v50, %v110
      %v112 = vpop.f32.mrf.mxu0
      %113 = vdwg.mxu0
      %v114 = vmax.f32 %v108, 0.0
      %v115 = vmax.f32 %v111, 0.0
      %116 = vst [vmem:[%s8] sm:$0xff] %v114
      %117 = vst [vmem:[%s8 + $0x8] sm:$0xff] %v115
    $region33: #{model_forward.2} parent=1 // pred_fallthru
      _
    %v118 = vld [vmem:[%s0] sm:$0xf]
    %v119 = vld [vmem:[%s0 + $0x4] sm:$0xf]
    %v120 = vld [vmem:[%s1] sm:$0xf]
    %v121 = vld [vmem:[%s1 + $0x4] sm:$0xf]
    %v122 = vld [vmem:[%s3] sm:$0xf]
    %v123 = vld [vmem:[%s3 + $0x4] sm:$0xf]
    %v124 = vld [vmem:[%s3 + $0x8] sm:$0xf]
    %v125 = vld [vmem:[%s3 + $0xc] sm:$0xf]
    %v128 = vunpack.c.l.b16 %v120
    %v129 = vunpack.c.l.b16 %v121
    %v130 = vpack.c.b16 %v129, %v128
    %v135 = vunpack.c.l.b16 %v122
    %v136 = vunpack.c.l.b16 %v123
    %v137 = vunpack.c.l.b16 %v124
    %v138 = vunpack.c.l.b16 %v125
    %v139 = vpack.c.b16 %v136, %v135
    %v140 = vpack.c.b16 %v138, %v137
    %vm143 = vcmask 261120
    %v145 = vsel %vm143, %v130, 0
    %147 = vmatprep.subr.bf16.mxu0 0
    %148 = vmatpush1.bf16.msra.mxu0 0
    %149 = vmatprep.subr.bf16.mxu0 0
    %150 = vmatpush1.bf16.msra.mxu0 0
    %151 = vmatprep.subr.bf16.mxu0 0
    %152 = vmatpush1.bf16.msra.mxu0 0
    %153 = vmatprep.subr.bf16.mxu0 0
    %154 = vmatpush1.bf16.msra.mxu0 0
    %155 = vmatprep.subr.bf16.mxu0 0
    %156 = vmatpush1.bf16.msra.mxu0 0
    %157 = vmatprep.subr.bf16.mxu0 0
    %158 = vmatpush1.bf16.msra.mxu0 0
    %159 = vmatprep.subr.bf16.mxu0 0
    %160 = vmatpush1.bf16.msra.mxu0 %v140
    %161 = vmatprep.subr.bf16.mxu0 0
    %162 = vmatpush1.bf16.msra.mxu0 %v139
    %163 = vmatprep.subr.bf16.mxu0 0
    %164 = vmatpush2.bf16.msra.mxu0 0
    %165 = vmatprep.subr.bf16.mxu0 0
    %166 = vmatpush2.bf16.msra.mxu0 0
    %167 = vmatprep.subr.bf16.mxu0 0
    %168 = vmatpush2.bf16.msra.mxu0 0
    %169 = vmatprep.subr.bf16.mxu0 0
    %170 = vmatpush2.bf16.msra.mxu0 0
    %171 = vmatprep.subr.bf16.mxu0 0
    %172 = vmatpush2.bf16.msra.mxu0 0
    %173 = vmatprep.subr.bf16.mxu0 0
    %174 = vmatpush2.bf16.msra.mxu0 0
    %175 = vmatprep.subr.bf16.mxu0 0
    %176 = vmatpush2.bf16.msra.mxu0 0
    %177 = vmatprep.subr.bf16.mxu0 0
    %178 = vmatpush2.bf16.msra.mxu0 0
    %179 = vmatprep.mubr.bf16.mxu0 0
    %180 = vmatmul.mubr.bf16.gmra.mxu0 %v145
    %v181 = vpop.f32.mrf.mxu0
    %v182 = vadd.f32 0.0, %v181
    %v183 = vpop.f32.mrf.mxu0
    %v184 = vpop.f32.mrf.mxu0
    %v185 = vadd.f32 0.0, %v184
    %v186 = vpop.f32.mrf.mxu0
    %187 = vdwg.mxu0
    %v188 = vld [vmem:[#allocation2] sm:$0xff]
    %v189 = vld [vmem:[#allocation2 + $0x8] sm:$0xff]
    %v190 = vpack.c.bf16 %v185, %v182
    %v193 = vunpack.c.l.b16 %v118
    %v194 = vunpack.c.l.b16 %v119
    %v195 = vpack.c.b16 %v194, %v193
    %vm196 = vcmask 130048
    %v198 = vsel %vm196, %v195, 0
    %200 = vmatprep.subr.bf16.mxu0 0
    %201 = vmatpush1.bf16.msra.mxu0 0
    %202 = vmatprep.subr.bf16.mxu0 0
    %203 = vmatpush1.bf16.msra.mxu0 0
    %204 = vmatprep.subr.bf16.mxu0 0
    %205 = vmatpush1.bf16.msra.mxu0 0
    %206 = vmatprep.subr.bf16.mxu0 0
    %207 = vmatpush1.bf16.msra.mxu0 0
    %208 = vmatprep.subr.bf16.mxu0 0
    %209 = vmatpush1.bf16.msra.mxu0 0
    %210 = vmatprep.subr.bf16.mxu0 0
    %211 = vmatpush1.bf16.msra.mxu0 0
    %212 = vmatprep.subr.bf16.mxu0 0
    %213 = vmatpush1.bf16.msra.mxu0 0
    %214 = vmatprep.subr.bf16.mxu0 0
    %215 = vmatpush1.bf16.msra.mxu0 %v190
    %216 = vmatprep.subr.bf16.mxu0 0
    %217 = vmatpush2.bf16.msra.mxu0 0
    %218 = vmatprep.subr.bf16.mxu0 0
    %219 = vmatpush2.bf16.msra.mxu0 0
    %220 = vmatprep.subr.bf16.mxu0 0
    %221 = vmatpush2.bf16.msra.mxu0 0
    %222 = vmatprep.subr.bf16.mxu0 0
    %223 = vmatpush2.bf16.msra.mxu0 0
    %224 = vmatprep.subr.bf16.mxu0 0
    %225 = vmatpush2.bf16.msra.mxu0 0
    %226 = vmatprep.subr.bf16.mxu0 0
    %227 = vmatpush2.bf16.msra.mxu0 0
    %228 = vmatprep.subr.bf16.mxu0 0
    %229 = vmatpush2.bf16.msra.mxu0 0
    %230 = vmatprep.subr.bf16.mxu0 0
    %231 = vmatpush2.bf16.msra.mxu0 0
    %232 = vmatprep.mubr.bf16.mxu0 0
    %233 = vmatmul.mubr.bf16.gmra.mxu0 %v198
    %v234 = vpop.f32.mrf.mxu0
    %v235 = vadd.f32 0.0, %v234
    %v236 = vpop.f32.mrf.mxu0
    %v237 = vpop.f32.mrf.mxu0
    %v238 = vadd.f32 0.0, %v237
    %v239 = vpop.f32.mrf.mxu0
    %240 = vdwg.mxu0
    %v241 = vadd.f32 %v188, %v235
    %v242 = vadd.f32 %v189, %v238
    %243 = vst [vmem:[#allocation2] sm:$0xff] %v241
    %244 = vst [vmem:[#allocation2 + $0x8] sm:$0xff] %v242
    %v245 = vld [vmem:[%s1] sm:$0xf]
    %v246 = vld [vmem:[%s1 + $0x4] sm:$0xf]
    %v247 = vld [vmem:[%s5] sm:$0xf]
    %v248 = vld [vmem:[%s5 + $0x4] sm:$0xf]
    %v249 = vld [vmem:[%s5 + $0x8] sm:$0xf]
    %v250 = vld [vmem:[%s5 + $0xc] sm:$0xf]
    %v251 = vld [vmem:[%s6] sm:$0x1]
    %v253 = vlaneseq
    %v254 = vshrl.u32 %v253, 7
    %v255 = vsub.s32 0, %v254
    %v256 = vrot.slane %v251, %v255
    %v260 = vunpack.c.l.b16 %v245
    %v261 = vunpack.c.l.b16 %v246
    %v262 = vpack.c.b16 %v261, %v260
    %v267 = vunpack.c.l.b16 %v247
    %v268 = vunpack.c.l.b16 %v248
    %v269 = vunpack.c.l.b16 %v249
    %v270 = vunpack.c.l.b16 %v250
    %v271 = vpack.c.b16 %v268, %v267
    %v272 = vpack.c.b16 %v270, %v269
    %v276 = vsel %vm143, %v262, 0
    %278 = vmatprep.subr.bf16.mxu0 0
    %279 = vmatpush1.bf16.msra.mxu0 0
    %280 = vmatprep.subr.bf16.mxu0 0
    %281 = vmatpush1.bf16.msra.mxu0 0
    %282 = vmatprep.subr.bf16.mxu0 0
    %283 = vmatpush1.bf16.msra.mxu0 0
    %284 = vmatprep.subr.bf16.mxu0 0
    %285 = vmatpush1.bf16.msra.mxu0 0
    %286 = vmatprep.subr.bf16.mxu0 0
    %287 = vmatpush1.bf16.msra.mxu0 0
    %288 = vmatprep.subr.bf16.mxu0 0
    %289 = vmatpush1.bf16.msra.mxu0 0
    %290 = vmatprep.subr.bf16.mxu0 0
    %291 = vmatpush1.bf16.msra.mxu0 %v272
    %292 = vmatprep.subr.bf16.mxu0 0
    %293 = vmatpush1.bf16.msra.mxu0 %v271
    %294 = vmatprep.subr.bf16.mxu0 0
    %295 = vmatpush2.bf16.msra.mxu0 0
    %296 = vmatprep.subr.bf16.mxu0 0
    %297 = vmatpush2.bf16.msra.mxu0 0
    %298 = vmatprep.subr.bf16.mxu0 0
    %299 = vmatpush2.bf16.msra.mxu0 0
    %300 = vmatprep.subr.bf16.mxu0 0
    %301 = vmatpush2.bf16.msra.mxu0 0
    %302 = vmatprep.subr.bf16.mxu0 0
    %303 = vmatpush2.bf16.msra.mxu0 0
    %304 = vmatprep.subr.bf16.mxu0 0
    %305 = vmatpush2.bf16.msra.mxu0 0
    %306 = vmatprep.subr.bf16.mxu0 0
    %307 = vmatpush2.bf16.msra.mxu0 0
    %308 = vmatprep.subr.bf16.mxu0 0
    %309 = vmatpush2.bf16.msra.mxu0 0
    %310 = vmatprep.mubr.bf16.mxu0 0
    %311 = vmatmul.mubr.bf16.gmra.mxu0 %v276
    %v312 = vpop.f32.mrf.mxu0
    %v313 = vadd.f32 %v256, %v312
    %v314 = vpop.f32.mrf.mxu0
    %v315 = vpop.f32.mrf.mxu0
    %v316 = vadd.f32 %v256, %v315
    %v317 = vpop.f32.mrf.mxu0
    %318 = vdwg.mxu0
    %v319 = vmax.f32 %v313, 0.0
    %v320 = vmax.f32 %v316, 0.0
    %v321 = vld [vmem:[#allocation3] sm:$0xff]
    %v322 = vld [vmem:[#allocation3 + $0x8] sm:$0xff]
    %v323 = vpack.c.bf16 %v320, %v319
    %324 = vmatprep.subr.bf16.mxu0 0
    %325 = vmatpush1.bf16.msra.mxu0 0
    %326 = vmatprep.subr.bf16.mxu0 0
    %327 = vmatpush1.bf16.msra.mxu0 0
    %328 = vmatprep.subr.bf16.mxu0 0
    %329 = vmatpush1.bf16.msra.mxu0 0
    %330 = vmatprep.subr.bf16.mxu0 0
    %331 = vmatpush1.bf16.msra.mxu0 0
    %332 = vmatprep.subr.bf16.mxu0 0
    %333 = vmatpush1.bf16.msra.mxu0 0
    %334 = vmatprep.subr.bf16.mxu0 0
    %335 = vmatpush1.bf16.msra.mxu0 0
    %336 = vmatprep.subr.bf16.mxu0 0
    %337 = vmatpush1.bf16.msra.mxu0 0
    %338 = vmatprep.subr.bf16.mxu0 0
    %339 = vmatpush1.bf16.msra.mxu0 %v323
    %340 = vmatprep.subr.bf16.mxu0 0
    %341 = vmatpush2.bf16.msra.mxu0 0
    %342 = vmatprep.subr.bf16.mxu0 0
    %343 = vmatpush2.bf16.msra.mxu0 0
    %344 = vmatprep.subr.bf16.mxu0 0
    %345 = vmatpush2.bf16.msra.mxu0 0
    %346 = vmatprep.subr.bf16.mxu0 0
    %347 = vmatpush2.bf16.msra.mxu0 0
    %348 = vmatprep.subr.bf16.mxu0 0
    %349 = vmatpush2.bf16.msra.mxu0 0
    %350 = vmatprep.subr.bf16.mxu0 0
    %351 = vmatpush2.bf16.msra.mxu0 0
    %352 = vmatprep.subr.bf16.mxu0 0
    %353 = vmatpush2.bf16.msra.mxu0 0
    %354 = vmatprep.subr.bf16.mxu0 0
    %355 = vmatpush2.bf16.msra.mxu0 0
    %356 = vmatprep.mubr.bf16.mxu0 0
    %357 = vmatmul.mubr.bf16.gmra.mxu0 %v198
    %v358 = vpop.f32.mrf.mxu0
    %v359 = vadd.f32 0.0, %v358
    %v360 = vpop.f32.mrf.mxu0
    %v361 = vpop.f32.mrf.mxu0
    %v362 = vadd.f32 0.0, %v361
    %v363 = vpop.f32.mrf.mxu0
    %364 = vdwg.mxu0
    %v365 = vadd.f32 %v321, %v359
    %v366 = vadd.f32 %v322, %v362
    %367 = vst [vmem:[#allocation3] sm:$0xff] %v365
    %368 = vst [vmem:[#allocation3 + $0x8] sm:$0xff] %v366
    // Predicated region
    $region34: #{model_forward.2} parent=1 // pred_check
      %p369 = pneg %p31
    $region35: #{model_forward.2} parent=1 // pred_check_branch
      %371 = sbr.rel (%p369) target = $region37
    $region36: #{model_forward.2} parent=1 // pred_region
      %v372 = vld [vmem:[#allocation2] sm:$0xff]
      %v373 = vld [vmem:[#allocation2 + $0x8] sm:$0xff]
      %v374 = vld [vmem:[%s4] sm:$0x1]
      %v376 = vlaneseq
      %v377 = vshrl.u32 %v376, 7
      %v378 = vsub.s32 0, %v377
      %v379 = vrot.slane %v374, %v378
      %v381 = vadd.f32 %v372, %v379
      %v382 = vadd.f32 %v373, %v379
      %v383 = vmax.f32 %v381, 0.0
      %v384 = vmax.f32 %v382, 0.0
      %v385 = vpack.c.bf16 %v384, %v383
      %v387 = vunpack.c.l.b16 %v385
      %v388 = vunpack.c.h.b16 %v385
      %v389 = vpack.c.b16 %v387, %v387
      %v390 = vpack.c.b16 %v388, %v388
      %393 = vst [vmem:[%s7] sm:$0xf] %v389
      %394 = vst [vmem:[%s7 + $0x4] sm:$0xf] %v390
      %v395 = vld [vmem:[#allocation3] sm:$0xff]
      %v396 = vld [vmem:[#allocation3 + $0x8] sm:$0xff]
      %397 = vst [vmem:[#allocation4] sm:$0xff] %v395
      %398 = vst [vmem:[#allocation4 + $0x8] sm:$0xff] %v396
    $region37: #{model_forward.2} parent=1 // pred_fallthru
      _
    // Predicated region
    $region38: #{model_forward.2} parent=1 // pred_check
      _
    $region39: #{model_forward.2} parent=1 // pred_check_branch
      %400 = sbr.rel (0) target = $region41
    $region40: #{model_forward.2} parent=1 // pred_region
      _
    $region41: #{model_forward.2} parent=1 // pred_fallthru
      _
    // Predicated region
    $region42: #{model_forward.2} parent=1 // pred_check
      _
    $region43: #{model_forward.2} parent=1 // pred_check_branch
      %402 = sbr.rel (0) target = $region45
    $region44: #{model_forward.2} parent=1 // pred_region
      _
    $region45: #{model_forward.2} parent=1 // pred_fallthru
      _
    // Predicated region
    $region46: #{model_forward.2} parent=1 // pred_check
      _
    $region47: #{model_forward.2} parent=1 // pred_check_branch
      %404 = sbr.rel (0) target = $region49
    $region48: #{model_forward.2} parent=1 // pred_region
      %s406 = ssub.s32 256, 256
      %407 = vsyncadd [#allocation5], %s406
      %s408 = sshll.u32 [#allocation4], 4
      %s409 = int_to_ptr.vmem [resolvable:$true] %s408
      %414 = dma.vmem_to_hbm [thread:$0]  %s409, 256, %s9, [#allocation5], 128, 128, 8
    $region49: #{model_forward.2} parent=1 // pred_fallthru
      _
    // Predicated region
    $region50: #{model_forward.2} parent=1 // pred_check
      _
    $region51: #{model_forward.2} parent=1 // pred_check_branch
      %416 = sbr.rel (0) target = $region53
    $region52: #{model_forward.2} parent=1 // pred_region
      _
    $region53: #{model_forward.2} parent=1 // pred_fallthru
      _
    // Predicated region
    $region54: #{model_forward.2} parent=1 // pred_check
      _
    $region55: #{model_forward.2} parent=1 // pred_check_branch
      %418 = sbr.rel (0) target = $region57
    $region56: #{model_forward.2} parent=1 // pred_region
      _
    $region57: #{model_forward.2} parent=1 // pred_fallthru
      _
    // Predicated region
    $region58: #{model_forward.2} parent=1 // pred_check
      _
    $region59: #{model_forward.2} parent=1 // pred_check_branch
      %420 = sbr.rel (0) target = $region61
    $region60: #{model_forward.2} parent=1 // pred_region
      %421 = dma.done [#allocation5], 256
    $region61: #{model_forward.2} parent=1 // pred_fallthru
      _
    %422 = vsyncpa [#allocation5], 1

</llo_original>
